<compile_context>
chip_gen: v6e
topology: v6e:2x2x1
jax: 0.10.0
libtpu: 0.0.40
codegen_flags: <defaults>
</compile_context>

<pallas_src>
import functools

import jax
import jax.numpy as jnp
from jax import lax
from jax.experimental import pallas as pl
from jax.experimental.pallas import tpu as pltpu

_NT = (((1,), (1,)), ((), ()))   # contract the last axis of both operands


def _make_vtsne_kernel(n_points, n_topics, batch, row_chunk):
    N, D, B, CH = n_points, n_topics, batch, row_chunk
    n_chunks = N // CH

    def kernel(mu_ref, lv_ref, i_ref, j_ref, pij_ref, eps_ref,
               out_ref, xa_ref):
        mu = mu_ref[...]                       # (N, D)
        lv = lv_ref[...]                       # (N, D)

        # Single exp over the table; exp(lv) == e * e.
        e = jnp.exp(0.5 * lv)

        # One fused host-side normal draw, sliced here (rows are 8-aligned).
        eps_all = eps_ref[:N, :]               # (N, D)
        eps_i = eps_ref[N:N + B, :]            # (B, D)
        eps_j = eps_ref[N + B:, :]             # (B, D)

        # Reparametrize the full embedding table.
        x = eps_all * e + mu                   # (N, D)

        # KLD of the reparametrization (noise independent):
        #   -0.5 * sum(1 + lv - mu^2 - exp(lv))
        kld = -0.5 * jnp.sum(1.0 + lv - mu * mu - e * e, keepdims=True)  # (1,1)

        # ---- Student-t normalizer over all pairs --------------------------
        # Augmented matmul:  X' = [-2x | 1+sq | 1],  Y' = [x | 1 | sq]
        #   (X' @ Y'^T)[k,l] = 1 + sq_k + sq_l - 2 x_k.x_l = 1 + ||x_k-x_l||^2
        ones_col = jnp.ones((N, 1), jnp.float32)
        sq = jnp.sum(x * x, axis=1, keepdims=True)                      # (N,1)
        x_aug = jnp.concatenate([-2.0 * x, 1.0 + sq, ones_col], axis=1)  # (N,D+2)
        y_aug = jnp.concatenate([x, ones_col, sq], axis=1)               # (N,D+2)
        xa_ref[...] = x_aug   # VMEM scratch; chunked loads bound live ranges

        def body(c, part_acc):
            r0 = pl.multiple_of(c * CH, CH)
            tile = lax.dot_general(xa_ref[pl.ds(r0, CH), :], y_aug, _NT,
                                   preferred_element_type=jnp.float32)  # (CH,N)
            return part_acc + jnp.sum(1.0 / tile, keepdims=True)

        part = lax.fori_loop(0, n_chunks, body,
                             jnp.zeros((1, 1), jnp.float32),
                             unroll=True) - jnp.float32(N)               # (1,1)

        # ---- gather the sampled (i, j) rows with fused one-hot matmuls ----
        ids = lax.broadcasted_iota(jnp.int32, (B, N), 1)
        onehot_i = (ids == i_ref[...]).astype(jnp.float32)               # (B,N)
        onehot_j = (ids == j_ref[...]).astype(jnp.float32)               # (B,N)
        mu_diff = jnp.dot(onehot_i - onehot_j, mu,
                          preferred_element_type=jnp.float32)            # (B,D)
        e_stack = jnp.dot(jnp.concatenate([onehot_i, onehot_j], axis=0), e,
                          preferred_element_type=jnp.float32)            # (2B,D)
        diff = eps_i * e_stack[:B] - eps_j * e_stack[B:] + mu_diff       # (B,D)

        # den_b = sum_d (1 + diff^2) = D + ||diff||^2, produced lane-dense.
        ones_row = jnp.ones((1, D), jnp.float32)
        den_row = jnp.float32(D) + lax.dot_general(
            ones_row, diff * diff, _NT,
            preferred_element_type=jnp.float32)                          # (1,B)

        # loss = sum(pij*(log pij - log qij))
        #      = sum(pij*log(pij*den)) + log(part)*sum(pij)
        pij = pij_ref[...]                                               # (1,B)
        pos = pij > 0.0
        plogp = jnp.where(pos,
                          pij * jnp.log(jnp.where(pos, pij * den_row, 1.0)),
                          0.0)
        loss_pair = (jnp.sum(plogp, keepdims=True)
                     + jnp.log(part) * jnp.sum(pij, keepdims=True))      # (1,1)
        loss = loss_pair + kld * 1e-07

        out_ref[...] = jnp.concatenate([loss, kld], axis=1)              # (1,2)

    return kernel


@functools.lru_cache(maxsize=None)
def _vtsne_pallas_call(n_points, n_topics, batch):
    N, D, B = n_points, n_topics, batch
    CH = 64 if N % 64 == 0 else (32 if N % 32 == 0 else N)
    vmem = pl.BlockSpec(memory_space=pltpu.MemorySpace.VMEM)

    flops = (2 * N * N * (D + 2)            # augmented distance matmul
             + 2 * B * N * D + 4 * B * N * D  # fused one-hot gathers
             + 2 * B * D + 10 * N * D + 2 * N * N)
    transcendentals = N * D + N * N + 2 * B + 4
    bytes_accessed = 4 * (2 * N * D + (N + 2 * B) * D + 3 * B + 2)

    return pl.pallas_call(
        _make_vtsne_kernel(N, D, B, CH),
        out_shape=jax.ShapeDtypeStruct((1, 2), jnp.float32),
        in_specs=[vmem] * 6,
        out_specs=vmem,
        scratch_shapes=[pltpu.VMEM((N, D + 2), jnp.float32)],
        cost_estimate=pl.CostEstimate(flops=flops,
                                      transcendentals=transcendentals,
                                      bytes_accessed=bytes_accessed),
    )


def vtsne_forward(pij, i, j, mu, lv, eps):
    """Fused VTSNE.forward.  `eps` is one (N + 2B, D) standard-normal draw."""
    N, D = mu.shape
    B = i.shape[0]
    call = _vtsne_pallas_call(N, D, B)
    out = call(
        mu.astype(jnp.float32), lv.astype(jnp.float32),
        i.reshape(B, 1).astype(jnp.int32), j.reshape(B, 1).astype(jnp.int32),
        pij.reshape(1, B).astype(jnp.float32), eps.astype(jnp.float32))
    return out[0, 0], out[0, 1]


def vtsne_forward_rng(pij, i, j, mu, lv, key):
    """Convenience wrapper: single fused normal draw for all three noises."""
    N, D = mu.shape
    B = i.shape[0]
    eps = jax.random.normal(key, (N + 2 * B, D), dtype=jnp.float32)
    return vtsne_forward(pij, i, j, mu, lv, eps)


def vtsne_reference(pij, i, j, mu, lv, eps):
    """Pure-JAX transcription of the PyTorch module (explicit noise)."""
    N = mu.shape[0]
    B = i.shape[0]
    eps_all, eps_i, eps_j = eps[:N], eps[N:N + B], eps[N + B:]
    x = eps_all * jnp.exp(0.5 * lv) + mu
    kld = -0.5 * jnp.sum(1.0 + lv - mu * mu - jnp.exp(lv))
    d2 = jnp.sum((x[None, :, :] - x[:, None, :]) ** 2, axis=2)
    part = jnp.sum(1.0 / (1.0 + d2)) - N
    xi = eps_i * jnp.exp(0.5 * lv[i]) + mu[i]
    xj = eps_j * jnp.exp(0.5 * lv[j]) + mu[j]
    num = 1.0 / jnp.sum(1.0 + (xi - xj) ** 2, axis=1)
    qij = num / part
    loss_kld = jnp.sum(pij * (jnp.log(pij) - jnp.log(qij)))
    return loss_kld + kld * 1e-07, kld


if __name__ == "__main__":
    # module config (small): n_points=128, n_topics=32, batch of 16 (i,j) pairs
    n_points, n_topics, batch = 128, 32, 16

    key = jax.random.PRNGKey(0)
    k_mu, k_lv, k_pij, k_i, k_j, k_eps = jax.random.split(key, 6)

    logits_mu = jax.random.normal(k_mu, (n_points, n_topics), dtype=jnp.float32)
    logits_lv = 0.1 * jax.random.normal(k_lv, (n_points, n_topics),
                                        dtype=jnp.float32)
    pij = jax.nn.softmax(jax.random.normal(k_pij, (batch,), dtype=jnp.float32))
    i_idx = jax.random.randint(k_i, (batch,), 0, n_points, dtype=jnp.int32)
    j_idx = jax.random.randint(k_j, (batch,), 0, n_points, dtype=jnp.int32)

    # One fused normal draw covering eps_all (N,D), eps_i (B,D), eps_j (B,D).
    eps = jax.random.normal(k_eps, (n_points + 2 * batch, n_topics),
                            dtype=jnp.float32)

    # Exact validation of the fused math against the reference.
    loss_k, kld_k = vtsne_forward(pij, i_idx, j_idx, logits_mu, logits_lv, eps)
    loss_k = jax.block_until_ready(loss_k)
    loss_r, kld_r = vtsne_reference(pij, i_idx, j_idx, logits_mu, logits_lv, eps)

    assert bool(jnp.isfinite(loss_k)), loss_k
    assert jnp.allclose(loss_k, loss_r, rtol=5e-3, atol=5e-3), (loss_k, loss_r)
    assert jnp.allclose(kld_k, kld_r, rtol=1e-3, atol=5e-2), (kld_k, kld_r)

    # Determinism for a fixed key through the RNG wrapper.
    la, _ = vtsne_forward_rng(pij, i_idx, j_idx, logits_mu, logits_lv,
                              jax.random.PRNGKey(1234))
    lb, _ = vtsne_forward_rng(pij, i_idx, j_idx, logits_mu, logits_lv,
                              jax.random.PRNGKey(1234))
    la = jax.block_until_ready(la)
    lb = jax.block_until_ready(lb)
    assert jnp.allclose(la, lb, rtol=0.0, atol=1e-5), (la, lb)

    print("KERNEL_OK")
</pallas_src>

<mosaic_0001>
module attributes {stable_mosaic.version = 11 : i64} {
  func.func @kernel(%arg0: memref<128x32xf32, #tpu.memory_space<vmem>>, %arg1: memref<128x32xf32, #tpu.memory_space<vmem>>, %arg2: memref<16x1xi32, #tpu.memory_space<vmem>>, %arg3: memref<16x1xi32, #tpu.memory_space<vmem>>, %arg4: memref<1x16xf32, #tpu.memory_space<vmem>>, %arg5: memref<160x32xf32, #tpu.memory_space<vmem>>, %arg6: memref<1x2xf32, #tpu.memory_space<vmem>>, %arg7: memref<128x34xf32, #tpu.memory_space<vmem>>) attributes {dimension_semantics = [], scalar_prefetch = 0 : i64, scratch_operands = 1 : i64, tpu.core_type = #tpu.core_type<tc>} {
    %c0 = arith.constant 0 : index
    %c0_0 = arith.constant 0 : index
    %0 = vector.load %arg0[%c0, %c0_0] : memref<128x32xf32, #tpu.memory_space<vmem>>, vector<128x32xf32>
    %c0_1 = arith.constant 0 : index
    %c0_2 = arith.constant 0 : index
    %1 = vector.load %arg1[%c0_1, %c0_2] : memref<128x32xf32, #tpu.memory_space<vmem>>, vector<128x32xf32>
    %cst = arith.constant 5.000000e-01 : f32
    %2 = vector.broadcast %cst : f32 to vector<128x32xf32>
    %3 = arith.mulf %2, %1 : vector<128x32xf32>
    %4 = math.exp %3 : vector<128x32xf32>
    %c0_3 = arith.constant 0 : index
    %c0_4 = arith.constant 0 : index
    %5 = vector.load %arg5[%c0_3, %c0_4] : memref<160x32xf32, #tpu.memory_space<vmem>>, vector<128x32xf32>
    %c128 = arith.constant 128 : index
    %c0_5 = arith.constant 0 : index
    %6 = vector.load %arg5[%c128, %c0_5] : memref<160x32xf32, #tpu.memory_space<vmem>>, vector<16x32xf32>
    %c144 = arith.constant 144 : index
    %c0_6 = arith.constant 0 : index
    %7 = vector.load %arg5[%c144, %c0_6] : memref<160x32xf32, #tpu.memory_space<vmem>>, vector<16x32xf32>
    %8 = arith.mulf %5, %4 : vector<128x32xf32>
    %9 = arith.addf %8, %0 : vector<128x32xf32>
    %cst_7 = arith.constant 1.000000e+00 : f32
    %10 = vector.broadcast %cst_7 : f32 to vector<128x32xf32>
    %11 = arith.addf %10, %1 : vector<128x32xf32>
    %12 = arith.mulf %0, %0 : vector<128x32xf32>
    %13 = arith.subf %11, %12 : vector<128x32xf32>
    %14 = arith.mulf %4, %4 : vector<128x32xf32>
    %15 = arith.subf %13, %14 : vector<128x32xf32>
    %16 = vector.shape_cast %15 : vector<128x32xf32> to vector<1x128x32xf32>
    %cst_8 = arith.constant dense<0.000000e+00> : vector<1xf32>
    %17 = vector.multi_reduction <add>, %16, %cst_8 [1, 2] : vector<1x128x32xf32> to vector<1xf32>
    %18 = vector.shape_cast %17 : vector<1xf32> to vector<1x1x1xf32>
    %19 = vector.extract %18[0, 0, 0] : f32 from vector<1x1x1xf32>
    %20 = vector.broadcast %19 : f32 to vector<1x1xf32>
    %cst_9 = arith.constant -5.000000e-01 : f32
    %21 = vector.broadcast %cst_9 : f32 to vector<1x1xf32>
    %22 = arith.mulf %21, %20 : vector<1x1xf32>
    %cst_10 = arith.constant 1.000000e+00 : f32
    %23 = vector.broadcast %cst_10 : f32 to vector<128x1xf32>
    %24 = arith.mulf %9, %9 : vector<128x32xf32>
    %cst_11 = arith.constant dense<0.000000e+00> : vector<128xf32>
    %25 = vector.multi_reduction <add>, %24, %cst_11 [1] : vector<128x32xf32> to vector<128xf32>
    %26 = vector.shape_cast %25 : vector<128xf32> to vector<128x1xf32>
    %cst_12 = arith.constant -2.000000e+00 : f32
    %27 = vector.broadcast %cst_12 : f32 to vector<128x32xf32>
    %28 = arith.mulf %27, %9 : vector<128x32xf32>
    %cst_13 = arith.constant 1.000000e+00 : f32
    %29 = vector.broadcast %cst_13 : f32 to vector<128x1xf32>
    %30 = arith.addf %29, %26 : vector<128x1xf32>
    %31 = tpu.concatenate %28, %30, %23 in 1 : vector<128x32xf32>, vector<128x1xf32>, vector<128x1xf32> -> vector<128x34xf32>
    %32 = tpu.concatenate %9, %23, %26 in 1 : vector<128x32xf32>, vector<128x1xf32>, vector<128x1xf32> -> vector<128x34xf32>
    %c0_14 = arith.constant 0 : index
    %c0_15 = arith.constant 0 : index
    %33 = vector.load %arg7[%c0_14, %c0_15] : memref<128x34xf32, #tpu.memory_space<vmem>>, vector<128x34xf32>
    tpu.vector_store %arg7[%c0_14, %c0_15], %31 {strides = array<i32>} : memref<128x34xf32, #tpu.memory_space<vmem>>, vector<128x34xf32>,
    %cst_16 = arith.constant 0.000000e+00 : f32
    %34 = vector.broadcast %cst_16 : f32 to vector<1x1xf32>
    %c0_i32 = arith.constant 0 : i32
    %c64_i32 = arith.constant 64 : i32
    %35 = arith.muli %c0_i32, %c64_i32 : i32
    %36 = tpu.assume_multiple %35, 64 : i32
    %37 = arith.index_cast %36 : i32 to index
    %c0_17 = arith.constant 0 : index
    %38 = vector.load %arg7[%37, %c0_17] : memref<128x34xf32, #tpu.memory_space<vmem>>, vector<64x34xf32>
    %cst_18 = arith.constant dense<0.000000e+00> : vector<64x128xf32>
    %39 = tpu.matmul %38, %32, %cst_18 {dimension_numbers = #tpu.dot_dimension_numbers<[1], [1], [0], [0], [0, 0, 1, 0], [], []>} : vector<64x34xf32>, vector<128x34xf32>, vector<64x128xf32> -> vector<64x128xf32>
    %cst_19 = arith.constant 1.000000e+00 : f32
    %40 = vector.broadcast %cst_19 : f32 to vector<64x128xf32>
    %41 = arith.divf %40, %39 : vector<64x128xf32>
    %42 = vector.shape_cast %41 : vector<64x128xf32> to vector<1x64x128xf32>
    %cst_20 = arith.constant dense<0.000000e+00> : vector<1xf32>
    %43 = vector.multi_reduction <add>, %42, %cst_20 [1, 2] : vector<1x64x128xf32> to vector<1xf32>
    %44 = vector.shape_cast %43 : vector<1xf32> to vector<1x1x1xf32>
    %45 = vector.extract %44[0, 0, 0] : f32 from vector<1x1x1xf32>
    %46 = vector.broadcast %45 : f32 to vector<1x1xf32>
    %47 = arith.addf %34, %46 : vector<1x1xf32>
    %c1_i32 = arith.constant 1 : i32
    %c64_i32_21 = arith.constant 64 : i32
    %48 = arith.muli %c1_i32, %c64_i32_21 : i32
    %49 = tpu.assume_multiple %48, 64 : i32
    %50 = arith.index_cast %49 : i32 to index
    %c0_22 = arith.constant 0 : index
    %51 = vector.load %arg7[%50, %c0_22] : memref<128x34xf32, #tpu.memory_space<vmem>>, vector<64x34xf32>
    %cst_23 = arith.constant dense<0.000000e+00> : vector<64x128xf32>
    %52 = tpu.matmul %51, %32, %cst_23 {dimension_numbers = #tpu.dot_dimension_numbers<[1], [1], [0], [0], [0, 0, 1, 0], [], []>} : vector<64x34xf32>, vector<128x34xf32>, vector<64x128xf32> -> vector<64x128xf32>
    %cst_24 = arith.constant 1.000000e+00 : f32
    %53 = vector.broadcast %cst_24 : f32 to vector<64x128xf32>
    %54 = arith.divf %53, %52 : vector<64x128xf32>
    %55 = vector.shape_cast %54 : vector<64x128xf32> to vector<1x64x128xf32>
    %cst_25 = arith.constant dense<0.000000e+00> : vector<1xf32>
    %56 = vector.multi_reduction <add>, %55, %cst_25 [1, 2] : vector<1x64x128xf32> to vector<1xf32>
    %57 = vector.shape_cast %56 : vector<1xf32> to vector<1x1x1xf32>
    %58 = vector.extract %57[0, 0, 0] : f32 from vector<1x1x1xf32>
    %59 = vector.broadcast %58 : f32 to vector<1x1xf32>
    %60 = arith.addf %47, %59 : vector<1x1xf32>
    %c2_i32 = arith.constant 2 : i32
    %cst_26 = arith.constant 1.280000e+02 : f32
    %61 = vector.broadcast %cst_26 : f32 to vector<1x1xf32>
    %62 = arith.subf %60, %61 : vector<1x1xf32>
    %63 = tpu.iota {dimensions = array<i32: 1>} : vector<16x128xi32>
    %c0_27 = arith.constant 0 : index
    %c0_28 = arith.constant 0 : index
    %64 = vector.load %arg2[%c0_27, %c0_28] : memref<16x1xi32, #tpu.memory_space<vmem>>, vector<16x1xi32>
    %65 = vector.broadcast %64 : vector<16x1xi32> to vector<16x128xi32>
    %66 = arith.cmpi eq, %63, %65 : vector<16x128xi32>
    %67 = arith.extui %66 : vector<16x128xi1> to vector<16x128xi32>
    %68 = arith.sitofp %67 : vector<16x128xi32> to vector<16x128xf32>
    %c0_29 = arith.constant 0 : index
    %c0_30 = arith.constant 0 : index
    %69 = vector.load %arg3[%c0_29, %c0_30] : memref<16x1xi32, #tpu.memory_space<vmem>>, vector<16x1xi32>
    %70 = vector.broadcast %69 : vector<16x1xi32> to vector<16x128xi32>
    %71 = arith.cmpi eq, %63, %70 : vector<16x128xi32>
    %72 = arith.extui %71 : vector<16x128xi1> to vector<16x128xi32>
    %73 = arith.sitofp %72 : vector<16x128xi32> to vector<16x128xf32>
    %74 = arith.subf %68, %73 : vector<16x128xf32>
    %cst_31 = arith.constant dense<0.000000e+00> : vector<16x32xf32>
    %75 = tpu.matmul %74, %0, %cst_31 {dimension_numbers = #tpu.dot_dimension_numbers<[1], [0], [0], [1], [0, 0, 1, 1], [], []>} : vector<16x128xf32>, vector<128x32xf32>, vector<16x32xf32> -> vector<16x32xf32>
    %76 = tpu.concatenate %68, %73 in 0 : vector<16x128xf32>, vector<16x128xf32> -> vector<32x128xf32>
    %cst_32 = arith.constant dense<0.000000e+00> : vector<32x32xf32>
    %77 = tpu.matmul %76, %4, %cst_32 {dimension_numbers = #tpu.dot_dimension_numbers<[1], [0], [0], [1], [0, 0, 1, 1], [], []>} : vector<32x128xf32>, vector<128x32xf32>, vector<32x32xf32> -> vector<32x32xf32>
    %78 = vector.extract_strided_slice %77 {offsets = [0, 0], sizes = [16, 32], strides = [1, 1]} : vector<32x32xf32> to vector<16x32xf32>
    %79 = arith.mulf %6, %78 : vector<16x32xf32>
    %80 = vector.extract_strided_slice %77 {offsets = [16, 0], sizes = [16, 32], strides = [1, 1]} : vector<32x32xf32> to vector<16x32xf32>
    %81 = arith.mulf %7, %80 : vector<16x32xf32>
    %82 = arith.subf %79, %81 : vector<16x32xf32>
    %83 = arith.addf %82, %75 : vector<16x32xf32>
    %cst_33 = arith.constant 1.000000e+00 : f32
    %84 = vector.broadcast %cst_33 : f32 to vector<1x32xf32>
    %85 = arith.mulf %83, %83 : vector<16x32xf32>
    %cst_34 = arith.constant dense<0.000000e+00> : vector<1x16xf32>
    %86 = tpu.matmul %84, %85, %cst_34 {dimension_numbers = #tpu.dot_dimension_numbers<[1], [1], [0], [0], [0, 0, 1, 0], [], []>} : vector<1x32xf32>, vector<16x32xf32>, vector<1x16xf32> -> vector<1x16xf32>
    %cst_35 = arith.constant 3.200000e+01 : f32
    %87 = vector.broadcast %cst_35 : f32 to vector<1x16xf32>
    %88 = arith.addf %87, %86 : vector<1x16xf32>
    %c0_36 = arith.constant 0 : index
    %c0_37 = arith.constant 0 : index
    %89 = vector.load %arg4[%c0_36, %c0_37] : memref<1x16xf32, #tpu.memory_space<vmem>>, vector<1x16xf32>
    %cst_38 = arith.constant 0.000000e+00 : f32
    %90 = vector.broadcast %cst_38 : f32 to vector<1x16xf32>
    %91 = arith.cmpf ogt, %89, %90 : vector<1x16xf32>
    %92 = arith.mulf %89, %88 : vector<1x16xf32>
    %cst_39 = arith.constant 1.000000e+00 : f32
    %93 = vector.broadcast %cst_39 : f32 to vector<1x16xf32>
    %94 = arith.select %91, %92, %93 : vector<1x16xi1>, vector<1x16xf32>
    %95 = math.log %94 : vector<1x16xf32>
    %96 = arith.mulf %89, %95 : vector<1x16xf32>
    %cst_40 = arith.constant 0.000000e+00 : f32
    %97 = vector.broadcast %cst_40 : f32 to vector<1x16xf32>
    %98 = arith.select %91, %96, %97 : vector<1x16xi1>, vector<1x16xf32>
    %99 = vector.shape_cast %98 : vector<1x16xf32> to vector<1x1x16xf32>
    %cst_41 = arith.constant dense<0.000000e+00> : vector<1xf32>
    %100 = vector.multi_reduction <add>, %99, %cst_41 [1, 2] : vector<1x1x16xf32> to vector<1xf32>
    %101 = vector.shape_cast %100 : vector<1xf32> to vector<1x1x1xf32>
    %102 = vector.extract %101[0, 0, 0] : f32 from vector<1x1x1xf32>
    %103 = vector.broadcast %102 : f32 to vector<1x1xf32>
    %104 = math.log %62 : vector<1x1xf32>
    %105 = vector.shape_cast %89 : vector<1x16xf32> to vector<1x1x16xf32>
    %cst_42 = arith.constant dense<0.000000e+00> : vector<1xf32>
    %106 = vector.multi_reduction <add>, %105, %cst_42 [1, 2] : vector<1x1x16xf32> to vector<1xf32>
    %107 = vector.shape_cast %106 : vector<1xf32> to vector<1x1x1xf32>
    %108 = vector.extract %107[0, 0, 0] : f32 from vector<1x1x1xf32>
    %109 = vector.broadcast %108 : f32 to vector<1x1xf32>
    %110 = arith.mulf %104, %109 : vector<1x1xf32>
    %111 = arith.addf %103, %110 : vector<1x1xf32>
    %cst_43 = arith.constant 1.000000e-07 : f32
    %112 = vector.broadcast %cst_43 : f32 to vector<1x1xf32>
    %113 = arith.mulf %22, %112 : vector<1x1xf32>
    %114 = arith.addf %111, %113 : vector<1x1xf32>
    %115 = tpu.concatenate %114, %22 in 1 : vector<1x1xf32>, vector<1x1xf32> -> vector<1x2xf32>
    %c0_44 = arith.constant 0 : index
    %c0_45 = arith.constant 0 : index
    %116 = vector.load %arg6[%c0_44, %c0_45] : memref<1x2xf32, #tpu.memory_space<vmem>>, vector<1x2xf32>
    tpu.vector_store %arg6[%c0_44, %c0_45], %115 {strides = array<i32>} : memref<1x2xf32, #tpu.memory_space<vmem>>, vector<1x2xf32>,
    return
  }
}

</mosaic_0001>

<llo_original>
// kernel: tpu_custom_call.1
$region0: #{tpu_custom_call.1}
  #allocation0 [shape = 'u32[]', space=smem, size = 0x4, offset = 0x4, fixed_abs, tag = 'smem constant byte address 0x4 - core index']
  #allocation1 [shape = 'u32[144,128]{1,0:T(1,128)}', space=vmem, size = 0x12000, scoped, tag = 'internal scratch']
  #allocation2 [shape = 'f32[128,34]{1,0:T(8,128)}', space=vmem, size = 0x10000, scoped, tag = 'scratch operand']
  %s0 = inlined_call_operand.vmem [shape: f32[128,32], index: 0, kind: input, shape index: {}]
  %s1 = inlined_call_operand.vmem [shape: f32[128,32], index: 1, kind: input, shape index: {}]
  %s2 = inlined_call_operand.vmem [shape: s32[16,1], index: 2, kind: input, shape index: {}]
  %s3 = inlined_call_operand.vmem [shape: s32[16,1], index: 3, kind: input, shape index: {}]
  %s4 = inlined_call_operand.vmem [shape: f32[1,16], index: 4, kind: input, shape index: {}]
  %s5 = inlined_call_operand.vmem [shape: f32[160,32], index: 5, kind: input, shape index: {}]
  %s6 = inlined_call_operand.hbm [shape: f32[1,2], index: 6, kind: output, shape index: {}]
  %s7 = sld [smem:[#allocation0]]
  $region34: #{tpu_custom_call.1} parent=0
    _
  %s9 = ssub.s32 1, %s7
  %s10 = scalar_select 0, %s9, %s7
  $region1: #{tpu_custom_call.1} parent=0
    #allocation3 [shape = 'u8[512]{0}', space=vmem, size = 0x400, scoped, tag = 'output window, operand 0, single buffered']
    #allocation4 [shape = 's32[1]{0}', space=sflag, size = 0x4, scoped, tag = 'scoped memory for tpu_custom_call.1']
    %11 = vsyncpa [#allocation4], 0
    // Predicated region
    $region2: #{tpu_custom_call.1} parent=1 // pred_check
      _
    $region3: #{tpu_custom_call.1} parent=1 // pred_check_branch
      %13 = sbr.rel (0) target = $region5
    $region4: #{tpu_custom_call.1} parent=1 // pred_region
      _
    $region5: #{tpu_custom_call.1} parent=1 // pred_fallthru
      _
    // Predicated region
    $region6: #{tpu_custom_call.1} parent=1 // pred_check
      _
    $region7: #{tpu_custom_call.1} parent=1 // pred_check_branch
      %15 = sbr.rel (0) target = $region9
    $region8: #{tpu_custom_call.1} parent=1 // pred_region
      _
    $region9: #{tpu_custom_call.1} parent=1 // pred_fallthru
      _
    // Predicated region
    $region10: #{tpu_custom_call.1} parent=1 // pred_check
      _
    $region11: #{tpu_custom_call.1} parent=1 // pred_check_branch
      %17 = sbr.rel (0) target = $region13
    $region12: #{tpu_custom_call.1} parent=1 // pred_region
      _
    $region13: #{tpu_custom_call.1} parent=1 // pred_fallthru
      _
    // Predicated region
    $region14: #{tpu_custom_call.1} parent=1 // pred_check
      _
    $region15: #{tpu_custom_call.1} parent=1 // pred_check_branch
      %19 = sbr.rel (0) target = $region17
    $region16: #{tpu_custom_call.1} parent=1 // pred_region
      _
    $region17: #{tpu_custom_call.1} parent=1 // pred_fallthru
      _
    // Predicated region
    $region18: #{tpu_custom_call.1} parent=1 // pred_check
      _
    $region19: #{tpu_custom_call.1} parent=1 // pred_check_branch
      %21 = sbr.rel (0) target = $region21
    $region20: #{tpu_custom_call.1} parent=1 // pred_region
      _
    $region21: #{tpu_custom_call.1} parent=1 // pred_fallthru
      _
    // Predicated region
    $region22: #{tpu_custom_call.1} parent=1 // pred_check
      _
    $region23: #{tpu_custom_call.1} parent=1 // pred_check_branch
      %23 = sbr.rel (0) target = $region25
    $region24: #{tpu_custom_call.1} parent=1 // pred_region
      _
    $region25: #{tpu_custom_call.1} parent=1 // pred_fallthru
      _
    %v24 = vld [vmem:[%s0] sm:$0xff]
    %v25 = vld [vmem:[%s0 + $0x8] sm:$0xff]
    %v26 = vld [vmem:[%s0 + $0x10] sm:$0xff]
    %v27 = vld [vmem:[%s0 + $0x18] sm:$0xff]
    %v28 = vld [vmem:[%s0 + $0x20] sm:$0xff]
    %v29 = vld [vmem:[%s0 + $0x28] sm:$0xff]
    %v30 = vld [vmem:[%s0 + $0x30] sm:$0xff]
    %v31 = vld [vmem:[%s0 + $0x38] sm:$0xff]
    %v32 = vld [vmem:[%s0 + $0x40] sm:$0xff]
    %v33 = vld [vmem:[%s0 + $0x48] sm:$0xff]
    %v34 = vld [vmem:[%s0 + $0x50] sm:$0xff]
    %v35 = vld [vmem:[%s0 + $0x58] sm:$0xff]
    %v36 = vld [vmem:[%s0 + $0x60] sm:$0xff]
    %v37 = vld [vmem:[%s0 + $0x68] sm:$0xff]
    %v38 = vld [vmem:[%s0 + $0x70] sm:$0xff]
    %v39 = vld [vmem:[%s0 + $0x78] sm:$0xff]
    %v40 = vld [vmem:[%s1] sm:$0xff]
    %v41 = vld [vmem:[%s1 + $0x8] sm:$0xff]
    %v42 = vld [vmem:[%s1 + $0x10] sm:$0xff]
    %v43 = vld [vmem:[%s1 + $0x18] sm:$0xff]
    %v44 = vld [vmem:[%s1 + $0x20] sm:$0xff]
    %v45 = vld [vmem:[%s1 + $0x28] sm:$0xff]
    %v46 = vld [vmem:[%s1 + $0x30] sm:$0xff]
    %v47 = vld [vmem:[%s1 + $0x38] sm:$0xff]
    %v48 = vld [vmem:[%s1 + $0x40] sm:$0xff]
    %v49 = vld [vmem:[%s1 + $0x48] sm:$0xff]
    %v50 = vld [vmem:[%s1 + $0x50] sm:$0xff]
    %v51 = vld [vmem:[%s1 + $0x58] sm:$0xff]
    %v52 = vld [vmem:[%s1 + $0x60] sm:$0xff]
    %v53 = vld [vmem:[%s1 + $0x68] sm:$0xff]
    %v54 = vld [vmem:[%s1 + $0x70] sm:$0xff]
    %v55 = vld [vmem:[%s1 + $0x78] sm:$0xff]
    %v56 = vmul.f32 %v40, 0.5
    %v57 = vmul.f32 %v41, 0.5
    %v58 = vmul.f32 %v42, 0.5
    %v59 = vmul.f32 %v43, 0.5
    %v60 = vmul.f32 %v44, 0.5
    %v61 = vmul.f32 %v45, 0.5
    %v62 = vmul.f32 %v46, 0.5
    %v63 = vmul.f32 %v47, 0.5
    %v64 = vmul.f32 %v48, 0.5
    %v65 = vmul.f32 %v49, 0.5
    %v66 = vmul.f32 %v50, 0.5
    %v67 = vmul.f32 %v51, 0.5
    %v68 = vmul.f32 %v52, 0.5
    %v69 = vmul.f32 %v53, 0.5
    %v70 = vmul.f32 %v54, 0.5
    %v71 = vmul.f32 %v55, 0.5
    %v72 = vmul.f32 %v56, 1.442695
    %v73 = vpow.pop %v72
    %v74 = vmul.f32 %v57, 1.442695
    %v75 = vpow.pop %v74
    %v76 = vmul.f32 %v58, 1.442695
    %v77 = vpow.pop %v76
    %v78 = vmul.f32 %v59, 1.442695
    %v79 = vpow.pop %v78
    %v80 = vmul.f32 %v60, 1.442695
    %v81 = vpow.pop %v80
    %v82 = vmul.f32 %v61, 1.442695
    %v83 = vpow.pop %v82
    %v84 = vmul.f32 %v62, 1.442695
    %v85 = vpow.pop %v84
    %v86 = vmul.f32 %v63, 1.442695
    %v87 = vpow.pop %v86
    %v88 = vmul.f32 %v64, 1.442695
    %v89 = vpow.pop %v88
    %v90 = vmul.f32 %v65, 1.442695
    %v91 = vpow.pop %v90
    %v92 = vmul.f32 %v66, 1.442695
    %v93 = vpow.pop %v92
    %v94 = vmul.f32 %v67, 1.442695
    %v95 = vpow.pop %v94
    %v96 = vmul.f32 %v68, 1.442695
    %v97 = vpow.pop %v96
    %v98 = vmul.f32 %v69, 1.442695
    %v99 = vpow.pop %v98
    %v100 = vmul.f32 %v70, 1.442695
    %v101 = vpow.pop %v100
    %v102 = vmul.f32 %v71, 1.442695
    %v103 = vpow.pop %v102
    %v104 = vld [vmem:[%s5] sm:$0xff]
    %v105 = vld [vmem:[%s5 + $0x8] sm:$0xff]
    %v106 = vld [vmem:[%s5 + $0x10] sm:$0xff]
    %v107 = vld [vmem:[%s5 + $0x18] sm:$0xff]
    %v108 = vld [vmem:[%s5 + $0x20] sm:$0xff]
    %v109 = vld [vmem:[%s5 + $0x28] sm:$0xff]
    %v110 = vld [vmem:[%s5 + $0x30] sm:$0xff]
    %v111 = vld [vmem:[%s5 + $0x38] sm:$0xff]
    %v112 = vld [vmem:[%s5 + $0x40] sm:$0xff]
    %v113 = vld [vmem:[%s5 + $0x48] sm:$0xff]
    %v114 = vld [vmem:[%s5 + $0x50] sm:$0xff]
    %v115 = vld [vmem:[%s5 + $0x58] sm:$0xff]
    %v116 = vld [vmem:[%s5 + $0x60] sm:$0xff]
    %v117 = vld [vmem:[%s5 + $0x68] sm:$0xff]
    %v118 = vld [vmem:[%s5 + $0x70] sm:$0xff]
    %v119 = vld [vmem:[%s5 + $0x78] sm:$0xff]
    %v120 = vld [vmem:[%s5 + $0x80] sm:$0xff]
    %v121 = vld [vmem:[%s5 + $0x88] sm:$0xff]
    %v122 = vld [vmem:[%s5 + $0x90] sm:$0xff]
    %v123 = vld [vmem:[%s5 + $0x98] sm:$0xff]
    %v124 = vmul.f32 %v104, %v73
    %v125 = vmul.f32 %v105, %v75
    %v126 = vmul.f32 %v106, %v77
    %v127 = vmul.f32 %v107, %v79
    %v128 = vmul.f32 %v108, %v81
    %v129 = vmul.f32 %v109, %v83
    %v130 = vmul.f32 %v110, %v85
    %v131 = vmul.f32 %v111, %v87
    %v132 = vmul.f32 %v112, %v89
    %v133 = vmul.f32 %v113, %v91
    %v134 = vmul.f32 %v114, %v93
    %v135 = vmul.f32 %v115, %v95
    %v136 = vmul.f32 %v116, %v97
    %v137 = vmul.f32 %v117, %v99
    %v138 = vmul.f32 %v118, %v101
    %v139 = vmul.f32 %v119, %v103
    %v140 = vadd.f32 %v124, %v24
    %v141 = vadd.f32 %v125, %v25
    %v142 = vadd.f32 %v126, %v26
    %v143 = vadd.f32 %v127, %v27
    %v144 = vadd.f32 %v128, %v28
    %v145 = vadd.f32 %v129, %v29
    %v146 = vadd.f32 %v130, %v30
    %v147 = vadd.f32 %v131, %v31
    %v148 = vadd.f32 %v132, %v32
    %v149 = vadd.f32 %v133, %v33
    %v150 = vadd.f32 %v134, %v34
    %v151 = vadd.f32 %v135, %v35
    %v152 = vadd.f32 %v136, %v36
    %v153 = vadd.f32 %v137, %v37
    %v154 = vadd.f32 %v138, %v38
    %v155 = vadd.f32 %v139, %v39
    %v156 = vadd.f32 %v40, 1.0
    %v157 = vadd.f32 %v41, 1.0
    %v158 = vadd.f32 %v42, 1.0
    %v159 = vadd.f32 %v43, 1.0
    %v160 = vadd.f32 %v44, 1.0
    %v161 = vadd.f32 %v45, 1.0
    %v162 = vadd.f32 %v46, 1.0
    %v163 = vadd.f32 %v47, 1.0
    %v164 = vadd.f32 %v48, 1.0
    %v165 = vadd.f32 %v49, 1.0
    %v166 = vadd.f32 %v50, 1.0
    %v167 = vadd.f32 %v51, 1.0
    %v168 = vadd.f32 %v52, 1.0
    %v169 = vadd.f32 %v53, 1.0
    %v170 = vadd.f32 %v54, 1.0
    %v171 = vadd.f32 %v55, 1.0
    %v172 = vmul.f32 %v24, %v24
    %v173 = vmul.f32 %v25, %v25
    %v174 = vmul.f32 %v26, %v26
    %v175 = vmul.f32 %v27, %v27
    %v176 = vmul.f32 %v28, %v28
    %v177 = vmul.f32 %v29, %v29
    %v178 = vmul.f32 %v30, %v30
    %v179 = vmul.f32 %v31, %v31
    %v180 = vmul.f32 %v32, %v32
    %v181 = vmul.f32 %v33, %v33
    %v182 = vmul.f32 %v34, %v34
    %v183 = vmul.f32 %v35, %v35
    %v184 = vmul.f32 %v36, %v36
    %v185 = vmul.f32 %v37, %v37
    %v186 = vmul.f32 %v38, %v38
    %v187 = vmul.f32 %v39, %v39
    %v188 = vsub.f32 %v156, %v172
    %v189 = vsub.f32 %v157, %v173
    %v190 = vsub.f32 %v158, %v174
    %v191 = vsub.f32 %v159, %v175
    %v192 = vsub.f32 %v160, %v176
    %v193 = vsub.f32 %v161, %v177
    %v194 = vsub.f32 %v162, %v178
    %v195 = vsub.f32 %v163, %v179
    %v196 = vsub.f32 %v164, %v180
    %v197 = vsub.f32 %v165, %v181
    %v198 = vsub.f32 %v166, %v182
    %v199 = vsub.f32 %v167, %v183
    %v200 = vsub.f32 %v168, %v184
    %v201 = vsub.f32 %v169, %v185
    %v202 = vsub.f32 %v170, %v186
    %v203 = vsub.f32 %v171, %v187
    %v204 = vmul.f32 %v73, %v73
    %v205 = vmul.f32 %v75, %v75
    %v206 = vmul.f32 %v77, %v77
    %v207 = vmul.f32 %v79, %v79
    %v208 = vmul.f32 %v81, %v81
    %v209 = vmul.f32 %v83, %v83
    %v210 = vmul.f32 %v85, %v85
    %v211 = vmul.f32 %v87, %v87
    %v212 = vmul.f32 %v89, %v89
    %v213 = vmul.f32 %v91, %v91
    %v214 = vmul.f32 %v93, %v93
    %v215 = vmul.f32 %v95, %v95
    %v216 = vmul.f32 %v97, %v97
    %v217 = vmul.f32 %v99, %v99
    %v218 = vmul.f32 %v101, %v101
    %v219 = vmul.f32 %v103, %v103
    %v220 = vsub.f32 %v188, %v204
    %v221 = vsub.f32 %v189, %v205
    %v222 = vsub.f32 %v190, %v206
    %v223 = vsub.f32 %v191, %v207
    %v224 = vsub.f32 %v192, %v208
    %v225 = vsub.f32 %v193, %v209
    %v226 = vsub.f32 %v194, %v210
    %v227 = vsub.f32 %v195, %v211
    %v228 = vsub.f32 %v196, %v212
    %v229 = vsub.f32 %v197, %v213
    %v230 = vsub.f32 %v198, %v214
    %v231 = vsub.f32 %v199, %v215
    %v232 = vsub.f32 %v200, %v216
    %v233 = vsub.f32 %v201, %v217
    %v234 = vsub.f32 %v202, %v218
    %v235 = vsub.f32 %v203, %v219
    %vm236 = vcmask 261120
    %v237 = vsel %vm236, %v220, 0.0
    %v238 = vsel %vm236, %v221, 0.0
    %v239 = vadd.f32 %v237, %v238
    %v240 = vsel %vm236, %v222, 0.0
    %v241 = vadd.f32 %v239, %v240
    %v242 = vsel %vm236, %v223, 0.0
    %v243 = vadd.f32 %v241, %v242
    %v244 = vsel %vm236, %v224, 0.0
    %v245 = vadd.f32 %v243, %v244
    %v246 = vsel %vm236, %v225, 0.0
    %v247 = vadd.f32 %v245, %v246
    %v248 = vsel %vm236, %v226, 0.0
    %v249 = vadd.f32 %v247, %v248
    %v250 = vsel %vm236, %v227, 0.0
    %v251 = vadd.f32 %v249, %v250
    %v252 = vsel %vm236, %v228, 0.0
    %v253 = vadd.f32 %v251, %v252
    %v254 = vsel %vm236, %v229, 0.0
    %v255 = vadd.f32 %v253, %v254
    %v256 = vsel %vm236, %v230, 0.0
    %v257 = vadd.f32 %v255, %v256
    %v258 = vsel %vm236, %v231, 0.0
    %v259 = vadd.f32 %v257, %v258
    %v260 = vsel %vm236, %v232, 0.0
    %v261 = vadd.f32 %v259, %v260
    %v262 = vsel %vm236, %v233, 0.0
    %v263 = vadd.f32 %v261, %v262
    %v264 = vsel %vm236, %v234, 0.0
    %v265 = vadd.f32 %v263, %v264
    %v266 = vsel %vm236, %v235, 0.0
    %v267 = vadd.f32 %v265, %v266
    %268 = vadd.xlane.f32.xlu0 %v267
    %v269 = vpop.xlane.xlu0 %268
    %v270 = vrot.slane %v269, 4
    %v271 = vadd.f32 %v269, %v270
    %v272 = vrot.slane %v271, 2
    %v273 = vadd.f32 %v271, %v272
    %v274 = vrot.slane %v273, 1
    %v275 = vadd.f32 %v273, %v274
    %s276 = vtos %v275
    %v277 = vstv %s276
    %v278 = vmul.f32 %v277, -0.5
    %v279 = vmul.f32 %v140, %v140
    %v280 = vmul.f32 %v141, %v141
    %v281 = vmul.f32 %v142, %v142
    %v282 = vmul.f32 %v143, %v143
    %v283 = vmul.f32 %v144, %v144
    %v284 = vmul.f32 %v145, %v145
    %v285 = vmul.f32 %v146, %v146
    %v286 = vmul.f32 %v147, %v147
    %v287 = vmul.f32 %v148, %v148
    %v288 = vmul.f32 %v149, %v149
    %v289 = vmul.f32 %v150, %v150
    %v290 = vmul.f32 %v151, %v151
    %v291 = vmul.f32 %v152, %v152
    %v292 = vmul.f32 %v153, %v153
    %v293 = vmul.f32 %v154, %v154
    %v294 = vmul.f32 %v155, %v155
    %v295 = vsel %vm236, %v279, 0.0
    %296 = vadd.xlane.f32.xlu0 %v295
    %v297 = vpop.xlane.xlu0 %296
    %v298 = vsel %vm236, %v280, 0.0
    %299 = vadd.xlane.f32.xlu0 %v298
    %v300 = vpop.xlane.xlu0 %299
    %v301 = vsel %vm236, %v281, 0.0
    %302 = vadd.xlane.f32.xlu0 %v301
    %v303 = vpop.xlane.xlu0 %302
    %v304 = vsel %vm236, %v282, 0.0
    %305 = vadd.xlane.f32.xlu0 %v304
    %v306 = vpop.xlane.xlu0 %305
    %v307 = vsel %vm236, %v283, 0.0
    %308 = vadd.xlane.f32.xlu0 %v307
    %v309 = vpop.xlane.xlu0 %308
    %v310 = vsel %vm236, %v284, 0.0
    %311 = vadd.xlane.f32.xlu0 %v310
    %v312 = vpop.xlane.xlu0 %311
    %v313 = vsel %vm236, %v285, 0.0
    %314 = vadd.xlane.f32.xlu0 %v313
    %v315 = vpop.xlane.xlu0 %314
    %v316 = vsel %vm236, %v286, 0.0
    %317 = vadd.xlane.f32.xlu0 %v316
    %v318 = vpop.xlane.xlu0 %317
    %v319 = vsel %vm236, %v287, 0.0
    %320 = vadd.xlane.f32.xlu0 %v319
    %v321 = vpop.xlane.xlu0 %320
    %v322 = vsel %vm236, %v288, 0.0
    %323 = vadd.xlane.f32.xlu0 %v322
    %v324 = vpop.xlane.xlu0 %323
    %v325 = vsel %vm236, %v289, 0.0
    %326 = vadd.xlane.f32.xlu0 %v325
    %v327 = vpop.xlane.xlu0 %326
    %v328 = vsel %vm236, %v290, 0.0
    %329 = vadd.xlane.f32.xlu0 %v328
    %v330 = vpop.xlane.xlu0 %329
    %v331 = vsel %vm236, %v291, 0.0
    %332 = vadd.xlane.f32.xlu0 %v331
    %v333 = vpop.xlane.xlu0 %332
    %v334 = vsel %vm236, %v292, 0.0
    %335 = vadd.xlane.f32.xlu0 %v334
    %v336 = vpop.xlane.xlu0 %335
    %v337 = vsel %vm236, %v293, 0.0
    %338 = vadd.xlane.f32.xlu0 %v337
    %v339 = vpop.xlane.xlu0 %338
    %v340 = vsel %vm236, %v294, 0.0
    %341 = vadd.xlane.f32.xlu0 %v340
    %v342 = vpop.xlane.xlu0 %341
    %v343 = vmul.f32 %v140, -2.0
    %v344 = vmul.f32 %v141, -2.0
    %v345 = vmul.f32 %v142, -2.0
    %v346 = vmul.f32 %v143, -2.0
    %v347 = vmul.f32 %v144, -2.0
    %v348 = vmul.f32 %v145, -2.0
    %v349 = vmul.f32 %v146, -2.0
    %v350 = vmul.f32 %v147, -2.0
    %v351 = vmul.f32 %v148, -2.0
    %v352 = vmul.f32 %v149, -2.0
    %v353 = vmul.f32 %v150, -2.0
    %v354 = vmul.f32 %v151, -2.0
    %v355 = vmul.f32 %v152, -2.0
    %v356 = vmul.f32 %v153, -2.0
    %v357 = vmul.f32 %v154, -2.0
    %v358 = vmul.f32 %v155, -2.0
    %v359 = vadd.f32 %v297, 1.0
    %v360 = vadd.f32 %v300, 1.0
    %v361 = vadd.f32 %v303, 1.0
    %v362 = vadd.f32 %v306, 1.0
    %v363 = vadd.f32 %v309, 1.0
    %v364 = vadd.f32 %v312, 1.0
    %v365 = vadd.f32 %v315, 1.0
    %v366 = vadd.f32 %v318, 1.0
    %v367 = vadd.f32 %v321, 1.0
    %v368 = vadd.f32 %v324, 1.0
    %v369 = vadd.f32 %v327, 1.0
    %v370 = vadd.f32 %v330, 1.0
    %v371 = vadd.f32 %v333, 1.0
    %v372 = vadd.f32 %v336, 1.0
    %v373 = vadd.f32 %v339, 1.0
    %v374 = vadd.f32 %v342, 1.0
    %v375 = vsel %vm236, %v343, %v359
    %v376 = vsel %vm236, %v344, %v360
    %v377 = vsel %vm236, %v345, %v361
    %v378 = vsel %vm236, %v346, %v362
    %v379 = vsel %vm236, %v347, %v363
    %v380 = vsel %vm236, %v348, %v364
    %v381 = vsel %vm236, %v349, %v365
    %v382 = vsel %vm236, %v350, %v366
    %v383 = vsel %vm236, %v351, %v367
    %v384 = vsel %vm236, %v352, %v368
    %v385 = vsel %vm236, %v353, %v369
    %v386 = vsel %vm236, %v354, %v370
    %v387 = vsel %vm236, %v355, %v371
    %v388 = vsel %vm236, %v356, %v372
    %v389 = vsel %vm236, %v357, %v373
    %v390 = vsel %vm236, %v358, %v374
    %vm391 = vcmask 269312
    %v392 = vsel %vm391, %v375, 1.0
    %v393 = vsel %vm391, %v376, 1.0
    %v394 = vsel %vm391, %v377, 1.0
    %v395 = vsel %vm391, %v378, 1.0
    %v396 = vsel %vm391, %v379, 1.0
    %v397 = vsel %vm391, %v380, 1.0
    %v398 = vsel %vm391, %v381, 1.0
    %v399 = vsel %vm391, %v382, 1.0
    %v400 = vsel %vm391, %v383, 1.0
    %v401 = vsel %vm391, %v384, 1.0
    %v402 = vsel %vm391, %v385, 1.0
    %v403 = vsel %vm391, %v386, 1.0
    %v404 = vsel %vm391, %v387, 1.0
    %v405 = vsel %vm391, %v388, 1.0
    %v406 = vsel %vm391, %v389, 1.0
    %v407 = vsel %vm391, %v390, 1.0
    %v408 = vsel %vm236, %v140, 1.0
    %v409 = vsel %vm236, %v141, 1.0
    %v410 = vsel %vm236, %v142, 1.0
    %v411 = vsel %vm236, %v143, 1.0
    %v412 = vsel %vm236, %v144, 1.0
    %v413 = vsel %vm236, %v145, 1.0
    %v414 = vsel %vm236, %v146, 1.0
    %v415 = vsel %vm236, %v147, 1.0
    %v416 = vsel %vm236, %v148, 1.0
    %v417 = vsel %vm236, %v149, 1.0
    %v418 = vsel %vm236, %v150, 1.0
    %v419 = vsel %vm236, %v151, 1.0
    %v420 = vsel %vm236, %v152, 1.0
    %v421 = vsel %vm236, %v153, 1.0
    %v422 = vsel %vm236, %v154, 1.0
    %v423 = vsel %vm236, %v155, 1.0
    %v424 = vsel %vm391, %v408, %v297
    %v425 = vsel %vm391, %v409, %v300
    %v426 = vsel %vm391, %v410, %v303
    %v427 = vsel %vm391, %v411, %v306
    %v428 = vsel %vm391, %v412, %v309
    %v429 = vsel %vm391, %v413, %v312
    %v430 = vsel %vm391, %v414, %v315
    %v431 = vsel %vm391, %v415, %v318
    %v432 = vsel %vm391, %v416, %v321
    %v433 = vsel %vm391, %v417, %v324
    %v434 = vsel %vm391, %v418, %v327
    %v435 = vsel %vm391, %v419, %v330
    %v436 = vsel %vm391, %v420, %v333
    %v437 = vsel %vm391, %v421, %v336
    %v438 = vsel %vm391, %v422, %v339
    %v439 = vsel %vm391, %v423, %v342
    %vm440 = vcmask 277504
    %441 = vst.msk [vmem:[#allocation2] sm:$0xff] %vm440, %v392
    %442 = vst.msk [vmem:[#allocation2 + $0x8] sm:$0xff] %vm440, %v393
    %443 = vst.msk [vmem:[#allocation2 + $0x10] sm:$0xff] %vm440, %v394
    %444 = vst.msk [vmem:[#allocation2 + $0x18] sm:$0xff] %vm440, %v395
    %445 = vst.msk [vmem:[#allocation2 + $0x20] sm:$0xff] %vm440, %v396
    %446 = vst.msk [vmem:[#allocation2 + $0x28] sm:$0xff] %vm440, %v397
    %447 = vst.msk [vmem:[#allocation2 + $0x30] sm:$0xff] %vm440, %v398
    %448 = vst.msk [vmem:[#allocation2 + $0x38] sm:$0xff] %vm440, %v399
    %449 = vst.msk [vmem:[#allocation2 + $0x40] sm:$0xff] %vm440, %v400
    %450 = vst.msk [vmem:[#allocation2 + $0x48] sm:$0xff] %vm440, %v401
    %451 = vst.msk [vmem:[#allocation2 + $0x50] sm:$0xff] %vm440, %v402
    %452 = vst.msk [vmem:[#allocation2 + $0x58] sm:$0xff] %vm440, %v403
    %453 = vst.msk [vmem:[#allocation2 + $0x60] sm:$0xff] %vm440, %v404
    %454 = vst.msk [vmem:[#allocation2 + $0x68] sm:$0xff] %vm440, %v405
    %455 = vst.msk [vmem:[#allocation2 + $0x70] sm:$0xff] %vm440, %v406
    %456 = vst.msk [vmem:[#allocation2 + $0x78] sm:$0xff] %vm440, %v407
    %v457 = vld [vmem:[#allocation2] sm:$0xff]
    %v458 = vld [vmem:[#allocation2 + $0x8] sm:$0xff]
    %v459 = vld [vmem:[#allocation2 + $0x10] sm:$0xff]
    %v460 = vld [vmem:[#allocation2 + $0x18] sm:$0xff]
    %v461 = vld [vmem:[#allocation2 + $0x20] sm:$0xff]
    %v462 = vld [vmem:[#allocation2 + $0x28] sm:$0xff]
    %v463 = vld [vmem:[#allocation2 + $0x30] sm:$0xff]
    %v464 = vld [vmem:[#allocation2 + $0x38] sm:$0xff]
    %v466 = vsel %vm440, %v457, 0
    %v469 = vsel %vm440, %v458, 0
    %v472 = vsel %vm440, %v459, 0
    %v475 = vsel %vm440, %v460, 0
    %v478 = vsel %vm440, %v461, 0
    %v481 = vsel %vm440, %v462, 0
    %v484 = vsel %vm440, %v463, 0
    %v487 = vsel %vm440, %v464, 0
    %v490 = vsel %vm440, %v424, 0
    %v493 = vsel %vm440, %v425, 0
    %v496 = vsel %vm440, %v426, 0
    %v499 = vsel %vm440, %v427, 0
    %v502 = vsel %vm440, %v428, 0
    %v505 = vsel %vm440, %v429, 0
    %v508 = vsel %vm440, %v430, 0
    %v511 = vsel %vm440, %v431, 0
    %v514 = vsel %vm440, %v432, 0
    %v517 = vsel %vm440, %v433, 0
    %v520 = vsel %vm440, %v434, 0
    %v523 = vsel %vm440, %v435, 0
    %v526 = vsel %vm440, %v436, 0
    %v529 = vsel %vm440, %v437, 0
    %v532 = vsel %vm440, %v438, 0
    %v535 = vsel %vm440, %v439, 0
    %537 = vmatprep.subr.mxu0 0.0
    %538 = vmatpush1.xpose.msra.mxu0 %v535
    %539 = vmatprep.subr.mxu0 0.0
    %540 = vmatpush1.xpose.msra.mxu0 %v532
    %541 = vmatprep.subr.mxu0 0.0
    %542 = vmatpush1.xpose.msra.mxu0 %v529
    %543 = vmatprep.subr.mxu0 0.0
    %544 = vmatpush1.xpose.msra.mxu0 %v526
    %545 = vmatprep.subr.mxu0 0.0
    %546 = vmatpush1.xpose.msra.mxu0 %v523
    %547 = vmatprep.subr.mxu0 0.0
    %548 = vmatpush1.xpose.msra.mxu0 %v520
    %549 = vmatprep.subr.mxu0 0.0
    %550 = vmatpush1.xpose.msra.mxu0 %v517
    %551 = vmatprep.subr.mxu0 0.0
    %552 = vmatpush1.xpose.msra.mxu0 %v514
    %553 = vmatprep.subr.mxu0 0.0
    %554 = vmatpush1.xpose.msra.mxu0 %v511
    %555 = vmatprep.subr.mxu0 0.0
    %556 = vmatpush1.xpose.msra.mxu0 %v508
    %557 = vmatprep.subr.mxu0 0.0
    %558 = vmatpush1.xpose.msra.mxu0 %v505
    %559 = vmatprep.subr.mxu0 0.0
    %560 = vmatpush1.xpose.msra.mxu0 %v502
    %561 = vmatprep.subr.mxu0 0.0
    %562 = vmatpush1.xpose.msra.mxu0 %v499
    %563 = vmatprep.subr.mxu0 0.0
    %564 = vmatpush1.xpose.msra.mxu0 %v496
    %565 = vmatprep.subr.mxu0 0.0
    %566 = vmatpush1.xpose.msra.mxu0 %v493
    %567 = vmatprep.subr.mxu0 0.0
    %568 = vmatpush1.xpose.msra.mxu0 %v490
    %569 = vmatprep.subr.mxu0 0.0
    %570 = vmatpush2.xpose.msra.mxu0 0.0
    %571 = vmatprep.subr.mxu0 0.0
    %572 = vmatpush2.xpose.msra.mxu0 0.0
    %573 = vmatprep.subr.mxu0 0.0
    %574 = vmatpush2.xpose.msra.mxu0 0.0
    %575 = vmatprep.subr.mxu0 0.0
    %576 = vmatpush2.xpose.msra.mxu0 0.0
    %577 = vmatprep.subr.mxu0 0.0
    %578 = vmatpush2.xpose.msra.mxu0 0.0
    %579 = vmatprep.subr.mxu0 0.0
    %580 = vmatpush2.xpose.msra.mxu0 0.0
    %581 = vmatprep.subr.mxu0 0.0
    %582 = vmatpush2.xpose.msra.mxu0 0.0
    %583 = vmatprep.subr.mxu0 0.0
    %584 = vmatpush2.xpose.msra.mxu0 0.0
    %585 = vmatprep.subr.mxu0 0.0
    %586 = vmatpush2.xpose.msra.mxu0 0.0
    %587 = vmatprep.subr.mxu0 0.0
    %588 = vmatpush2.xpose.msra.mxu0 0.0
    %589 = vmatprep.subr.mxu0 0.0
    %590 = vmatpush2.xpose.msra.mxu0 0.0
    %591 = vmatprep.subr.mxu0 0.0
    %592 = vmatpush2.xpose.msra.mxu0 0.0
    %593 = vmatprep.subr.mxu0 0.0
    %594 = vmatpush2.xpose.msra.mxu0 0.0
    %595 = vmatprep.subr.mxu0 0.0
    %596 = vmatpush2.xpose.msra.mxu0 0.0
    %597 = vmatprep.subr.mxu0 0.0
    %598 = vmatpush2.xpose.msra.mxu0 0.0
    %599 = vmatprep.subr.mxu0 0.0
    %600 = vmatpush2.xpose.msra.mxu0 0.0
    %601 = vmatprep.mubr.f32.mxu0 0.0
    %602 = vmatmul.mubr.f32.gmra.mxu0 %v466
    %v603 = vpop.f32.mrf.mxu0
    %v604 = vadd.f32 0.0, %v603
    %v605 = vpop.f32.mrf.mxu0
    %606 = vmatprep.mubr.f32.mxu0 0.0
    %607 = vmatmul.mubr.f32.gmra.mxu0 %v469
    %v608 = vpop.f32.mrf.mxu0
    %v609 = vadd.f32 0.0, %v608
    %v610 = vpop.f32.mrf.mxu0
    %611 = vmatprep.mubr.f32.mxu0 0.0
    %612 = vmatmul.mubr.f32.gmra.mxu0 %v472
    %v613 = vpop.f32.mrf.mxu0
    %v614 = vadd.f32 0.0, %v613
    %v615 = vpop.f32.mrf.mxu0
    %616 = vmatprep.mubr.f32.mxu0 0.0
    %617 = vmatmul.mubr.f32.gmra.mxu0 %v475
    %v618 = vpop.f32.mrf.mxu0
    %v619 = vadd.f32 0.0, %v618
    %v620 = vpop.f32.mrf.mxu0
    %621 = vmatprep.mubr.f32.mxu0 0.0
    %622 = vmatmul.mubr.f32.gmra.mxu0 %v478
    %v623 = vpop.f32.mrf.mxu0
    %v624 = vadd.f32 0.0, %v623
    %v625 = vpop.f32.mrf.mxu0
    %626 = vmatprep.mubr.f32.mxu0 0.0
    %627 = vmatmul.mubr.f32.gmra.mxu0 %v481
    %v628 = vpop.f32.mrf.mxu0
    %v629 = vadd.f32 0.0, %v628
    %v630 = vpop.f32.mrf.mxu0
    %631 = vmatprep.mubr.f32.mxu0 0.0
    %632 = vmatmul.mubr.f32.gmra.mxu0 %v484
    %v633 = vpop.f32.mrf.mxu0
    %v634 = vadd.f32 0.0, %v633
    %v635 = vpop.f32.mrf.mxu0
    %636 = vmatprep.mubr.f32.mxu0 0.0
    %637 = vmatmul.mubr.f32.gmra.mxu0 %v487
    %v638 = vpop.f32.mrf.mxu0
    %v639 = vadd.f32 0.0, %v638
    %v640 = vpop.f32.mrf.mxu0
    %641 = vdwg.mxu0
    %v642 = vrcp.pop %v604
    %v643 = vmul.f32 1.0, %v642
    %v644 = vrcp.pop %v609
    %v645 = vmul.f32 1.0, %v644
    %v646 = vrcp.pop %v614
    %v647 = vmul.f32 1.0, %v646
    %v648 = vrcp.pop %v619
    %v649 = vmul.f32 1.0, %v648
    %v650 = vrcp.pop %v624
    %v651 = vmul.f32 1.0, %v650
    %v652 = vrcp.pop %v629
    %v653 = vmul.f32 1.0, %v652
    %v654 = vrcp.pop %v634
    %v655 = vmul.f32 1.0, %v654
    %v656 = vrcp.pop %v639
    %v657 = vmul.f32 1.0, %v656
    %v658 = vadd.f32 %v643, %v645
    %v659 = vadd.f32 %v658, %v647
    %v660 = vadd.f32 %v659, %v649
    %v661 = vadd.f32 %v660, %v651
    %v662 = vadd.f32 %v661, %v653
    %v663 = vadd.f32 %v662, %v655
    %v664 = vadd.f32 %v663, %v657
    %665 = vadd.xlane.f32.xlu0 %v664
    %v666 = vpop.xlane.xlu0 %665
    %v667 = vrot.slane %v666, 4
    %v668 = vadd.f32 %v666, %v667
    %v669 = vrot.slane %v668, 2
    %v670 = vadd.f32 %v668, %v669
    %v671 = vrot.slane %v670, 1
    %v672 = vadd.f32 %v670, %v671
    %s673 = vtos %v672
    %v674 = vstv %s673
    %v675 = vadd.f32 %v674, 0.0
    %s676 = scalar_lea.vmem [#allocation2], 64
    %v677 = vld [vmem:[%s676] sm:$0xff]
    %v678 = vld [vmem:[%s676 + $0x8] sm:$0xff]
    %v679 = vld [vmem:[%s676 + $0x10] sm:$0xff]
    %v680 = vld [vmem:[%s676 + $0x18] sm:$0xff]
    %v681 = vld [vmem:[%s676 + $0x20] sm:$0xff]
    %v682 = vld [vmem:[%s676 + $0x28] sm:$0xff]
    %v683 = vld [vmem:[%s676 + $0x30] sm:$0xff]
    %v684 = vld [vmem:[%s676 + $0x38] sm:$0xff]
    %v686 = vsel %vm440, %v677, 0
    %v689 = vsel %vm440, %v678, 0
    %v692 = vsel %vm440, %v679, 0
    %v695 = vsel %vm440, %v680, 0
    %v698 = vsel %vm440, %v681, 0
    %v701 = vsel %vm440, %v682, 0
    %v704 = vsel %vm440, %v683, 0
    %v707 = vsel %vm440, %v684, 0
    %709 = vmatprep.subr.mxu0 0.0
    %710 = vmatpush1.xpose.msra.mxu0 %v535
    %711 = vmatprep.subr.mxu0 0.0
    %712 = vmatpush1.xpose.msra.mxu0 %v532
    %713 = vmatprep.subr.mxu0 0.0
    %714 = vmatpush1.xpose.msra.mxu0 %v529
    %715 = vmatprep.subr.mxu0 0.0
    %716 = vmatpush1.xpose.msra.mxu0 %v526
    %717 = vmatprep.subr.mxu0 0.0
    %718 = vmatpush1.xpose.msra.mxu0 %v523
    %719 = vmatprep.subr.mxu0 0.0
    %720 = vmatpush1.xpose.msra.mxu0 %v520
    %721 = vmatprep.subr.mxu0 0.0
    %722 = vmatpush1.xpose.msra.mxu0 %v517
    %723 = vmatprep.subr.mxu0 0.0
    %724 = vmatpush1.xpose.msra.mxu0 %v514
    %725 = vmatprep.subr.mxu0 0.0
    %726 = vmatpush1.xpose.msra.mxu0 %v511
    %727 = vmatprep.subr.mxu0 0.0
    %728 = vmatpush1.xpose.msra.mxu0 %v508
    %729 = vmatprep.subr.mxu0 0.0
    %730 = vmatpush1.xpose.msra.mxu0 %v505
    %731 = vmatprep.subr.mxu0 0.0
    %732 = vmatpush1.xpose.msra.mxu0 %v502
    %733 = vmatprep.subr.mxu0 0.0
    %734 = vmatpush1.xpose.msra.mxu0 %v499
    %735 = vmatprep.subr.mxu0 0.0
    %736 = vmatpush1.xpose.msra.mxu0 %v496
    %737 = vmatprep.subr.mxu0 0.0
    %738 = vmatpush1.xpose.msra.mxu0 %v493
    %739 = vmatprep.subr.mxu0 0.0
    %740 = vmatpush1.xpose.msra.mxu0 %v490
    %741 = vmatprep.subr.mxu0 0.0
    %742 = vmatpush2.xpose.msra.mxu0 0.0
    %743 = vmatprep.subr.mxu0 0.0
    %744 = vmatpush2.xpose.msra.mxu0 0.0
    %745 = vmatprep.subr.mxu0 0.0
    %746 = vmatpush2.xpose.msra.mxu0 0.0
    %747 = vmatprep.subr.mxu0 0.0
    %748 = vmatpush2.xpose.msra.mxu0 0.0
    %749 = vmatprep.subr.mxu0 0.0
    %750 = vmatpush2.xpose.msra.mxu0 0.0
    %751 = vmatprep.subr.mxu0 0.0
    %752 = vmatpush2.xpose.msra.mxu0 0.0
    %753 = vmatprep.subr.mxu0 0.0
    %754 = vmatpush2.xpose.msra.mxu0 0.0
    %755 = vmatprep.subr.mxu0 0.0
    %756 = vmatpush2.xpose.msra.mxu0 0.0
    %757 = vmatprep.subr.mxu0 0.0
    %758 = vmatpush2.xpose.msra.mxu0 0.0
    %759 = vmatprep.subr.mxu0 0.0
    %760 = vmatpush2.xpose.msra.mxu0 0.0
    %761 = vmatprep.subr.mxu0 0.0
    %762 = vmatpush2.xpose.msra.mxu0 0.0
    %763 = vmatprep.subr.mxu0 0.0
    %764 = vmatpush2.xpose.msra.mxu0 0.0
    %765 = vmatprep.subr.mxu0 0.0
    %766 = vmatpush2.xpose.msra.mxu0 0.0
    %767 = vmatprep.subr.mxu0 0.0
    %768 = vmatpush2.xpose.msra.mxu0 0.0
    %769 = vmatprep.subr.mxu0 0.0
    %770 = vmatpush2.xpose.msra.mxu0 0.0
    %771 = vmatprep.subr.mxu0 0.0
    %772 = vmatpush2.xpose.msra.mxu0 0.0
    %773 = vmatprep.mubr.f32.mxu0 0.0
    %774 = vmatmul.mubr.f32.gmra.mxu0 %v686
    %v775 = vpop.f32.mrf.mxu0
    %v776 = vadd.f32 0.0, %v775
    %v777 = vpop.f32.mrf.mxu0
    %778 = vmatprep.mubr.f32.mxu0 0.0
    %779 = vmatmul.mubr.f32.gmra.mxu0 %v689
    %v780 = vpop.f32.mrf.mxu0
    %v781 = vadd.f32 0.0, %v780
    %v782 = vpop.f32.mrf.mxu0
    %783 = vmatprep.mubr.f32.mxu0 0.0
    %784 = vmatmul.mubr.f32.gmra.mxu0 %v692
    %v785 = vpop.f32.mrf.mxu0
    %v786 = vadd.f32 0.0, %v785
    %v787 = vpop.f32.mrf.mxu0
    %788 = vmatprep.mubr.f32.mxu0 0.0
    %789 = vmatmul.mubr.f32.gmra.mxu0 %v695
    %v790 = vpop.f32.mrf.mxu0
    %v791 = vadd.f32 0.0, %v790
    %v792 = vpop.f32.mrf.mxu0
    %793 = vmatprep.mubr.f32.mxu0 0.0
    %794 = vmatmul.mubr.f32.gmra.mxu0 %v698
    %v795 = vpop.f32.mrf.mxu0
    %v796 = vadd.f32 0.0, %v795
    %v797 = vpop.f32.mrf.mxu0
    %798 = vmatprep.mubr.f32.mxu0 0.0
    %799 = vmatmul.mubr.f32.gmra.mxu0 %v701
    %v800 = vpop.f32.mrf.mxu0
    %v801 = vadd.f32 0.0, %v800
    %v802 = vpop.f32.mrf.mxu0
    %803 = vmatprep.mubr.f32.mxu0 0.0
    %804 = vmatmul.mubr.f32.gmra.mxu0 %v704
    %v805 = vpop.f32.mrf.mxu0
    %v806 = vadd.f32 0.0, %v805
    %v807 = vpop.f32.mrf.mxu0
    %808 = vmatprep.mubr.f32.mxu0 0.0
    %809 = vmatmul.mubr.f32.gmra.mxu0 %v707
    %v810 = vpop.f32.mrf.mxu0
    %v811 = vadd.f32 0.0, %v810
    %v812 = vpop.f32.mrf.mxu0
    %813 = vdwg.mxu0
    %v814 = vrcp.pop %v776
    %v815 = vmul.f32 1.0, %v814
    %v816 = vrcp.pop %v781
    %v817 = vmul.f32 1.0, %v816
    %v818 = vrcp.pop %v786
    %v819 = vmul.f32 1.0, %v818
    %v820 = vrcp.pop %v791
    %v821 = vmul.f32 1.0, %v820
    %v822 = vrcp.pop %v796
    %v823 = vmul.f32 1.0, %v822
    %v824 = vrcp.pop %v801
    %v825 = vmul.f32 1.0, %v824
    %v826 = vrcp.pop %v806
    %v827 = vmul.f32 1.0, %v826
    %v828 = vrcp.pop %v811
    %v829 = vmul.f32 1.0, %v828
    %v830 = vadd.f32 %v815, %v817
    %v831 = vadd.f32 %v830, %v819
    %v832 = vadd.f32 %v831, %v821
    %v833 = vadd.f32 %v832, %v823
    %v834 = vadd.f32 %v833, %v825
    %v835 = vadd.f32 %v834, %v827
    %v836 = vadd.f32 %v835, %v829
    %837 = vadd.xlane.f32.xlu0 %v836
    %v838 = vpop.xlane.xlu0 %837
    %v839 = vrot.slane %v838, 4
    %v840 = vadd.f32 %v838, %v839
    %v841 = vrot.slane %v840, 2
    %v842 = vadd.f32 %v840, %v841
    %v843 = vrot.slane %v842, 1
    %v844 = vadd.f32 %v842, %v843
    %s845 = vtos %v844
    %v846 = vstv %s845
    %v847 = vadd.f32 %v675, %v846
    %v848 = vsub.f32 %v847, 128.0
    %v849 = vlaneseq
    %v850 = vand.u32 %v849, 127
    %v851 = vld [vmem:[%s2] sm:$0xff]
    %v852 = vld [vmem:[%s2 + $0x8] sm:$0xff]
    %853 = vset.pattern.permute.xlu0 0
    %854 = vperm.xlu0 %853, %v851
    %v855 = vpop.permute.xlu0 %854
    %856 = vset.pattern.permute.xlu0 0
    %857 = vperm.xlu0 %856, %v852
    %v858 = vpop.permute.xlu0 %857
    %vm859 = vcmp.eq.s32.totalorder %v850, %v855
    %vm860 = vcmp.eq.s32.totalorder %v850, %v858
    %v861 = vsel %vm859, 1, 0
    %v862 = vsel %vm860, 1, 0
    %v863 = vcvt.s32.f32 %v861
    %v864 = vcvt.s32.f32 %v862
    %v865 = vld [vmem:[%s3] sm:$0xff]
    %v866 = vld [vmem:[%s3 + $0x8] sm:$0xff]
    %867 = vset.pattern.permute.xlu0 0
    %868 = vperm.xlu0 %867, %v865
    %v869 = vpop.permute.xlu0 %868
    %870 = vset.pattern.permute.xlu0 0
    %871 = vperm.xlu0 %870, %v866
    %v872 = vpop.permute.xlu0 %871
    %vm873 = vcmp.eq.s32.totalorder %v850, %v869
    %vm874 = vcmp.eq.s32.totalorder %v850, %v872
    %v875 = vsel %vm873, 1, 0
    %v876 = vsel %vm874, 1, 0
    %v877 = vcvt.s32.f32 %v875
    %v878 = vcvt.s32.f32 %v876
    %v879 = vsub.f32 %v863, %v877
    %v880 = vsub.f32 %v864, %v878
    %881 = vmatprep.subr.mxu0 0.0
    %882 = vmatpush1.msra.mxu0 %v39
    %883 = vmatprep.subr.mxu0 0.0
    %884 = vmatpush1.msra.mxu0 %v38
    %885 = vmatprep.subr.mxu0 0.0
    %886 = vmatpush1.msra.mxu0 %v37
    %887 = vmatprep.subr.mxu0 0.0
    %888 = vmatpush1.msra.mxu0 %v36
    %889 = vmatprep.subr.mxu0 0.0
    %890 = vmatpush1.msra.mxu0 %v35
    %891 = vmatprep.subr.mxu0 0.0
    %892 = vmatpush1.msra.mxu0 %v34
    %893 = vmatprep.subr.mxu0 0.0
    %894 = vmatpush1.msra.mxu0 %v33
    %895 = vmatprep.subr.mxu0 0.0
    %896 = vmatpush1.msra.mxu0 %v32
    %897 = vmatprep.subr.mxu0 0.0
    %898 = vmatpush1.msra.mxu0 %v31
    %899 = vmatprep.subr.mxu0 0.0
    %900 = vmatpush1.msra.mxu0 %v30
    %901 = vmatprep.subr.mxu0 0.0
    %902 = vmatpush1.msra.mxu0 %v29
    %903 = vmatprep.subr.mxu0 0.0
    %904 = vmatpush1.msra.mxu0 %v28
    %905 = vmatprep.subr.mxu0 0.0
    %906 = vmatpush1.msra.mxu0 %v27
    %907 = vmatprep.subr.mxu0 0.0
    %908 = vmatpush1.msra.mxu0 %v26
    %909 = vmatprep.subr.mxu0 0.0
    %910 = vmatpush1.msra.mxu0 %v25
    %911 = vmatprep.subr.mxu0 0.0
    %912 = vmatpush1.msra.mxu0 %v24
    %913 = vmatprep.subr.mxu0 0.0
    %914 = vmatpush2.msra.mxu0 0.0
    %915 = vmatprep.subr.mxu0 0.0
    %916 = vmatpush2.msra.mxu0 0.0
    %917 = vmatprep.subr.mxu0 0.0
    %918 = vmatpush2.msra.mxu0 0.0
    %919 = vmatprep.subr.mxu0 0.0
    %920 = vmatpush2.msra.mxu0 0.0
    %921 = vmatprep.subr.mxu0 0.0
    %922 = vmatpush2.msra.mxu0 0.0
    %923 = vmatprep.subr.mxu0 0.0
    %924 = vmatpush2.msra.mxu0 0.0
    %925 = vmatprep.subr.mxu0 0.0
    %926 = vmatpush2.msra.mxu0 0.0
    %927 = vmatprep.subr.mxu0 0.0
    %928 = vmatpush2.msra.mxu0 0.0
    %929 = vmatprep.subr.mxu0 0.0
    %930 = vmatpush2.msra.mxu0 0.0
    %931 = vmatprep.subr.mxu0 0.0
    %932 = vmatpush2.msra.mxu0 0.0
    %933 = vmatprep.subr.mxu0 0.0
    %934 = vmatpush2.msra.mxu0 0.0
    %935 = vmatprep.subr.mxu0 0.0
    %936 = vmatpush2.msra.mxu0 0.0
    %937 = vmatprep.subr.mxu0 0.0
    %938 = vmatpush2.msra.mxu0 0.0
    %939 = vmatprep.subr.mxu0 0.0
    %940 = vmatpush2.msra.mxu0 0.0
    %941 = vmatprep.subr.mxu0 0.0
    %942 = vmatpush2.msra.mxu0 0.0
    %943 = vmatprep.subr.mxu0 0.0
    %944 = vmatpush2.msra.mxu0 0.0
    %945 = vmatprep.mubr.f32.mxu0 0.0
    %946 = vmatmul.mubr.f32.gmra.mxu0 %v879
    %v947 = vpop.f32.mrf.mxu0
    %v948 = vadd.f32 0.0, %v947
    %v949 = vpop.f32.mrf.mxu0
    %950 = vmatprep.mubr.f32.mxu0 0.0
    %951 = vmatmul.mubr.f32.gmra.mxu0 %v880
    %v952 = vpop.f32.mrf.mxu0
    %v953 = vadd.f32 0.0, %v952
    %v954 = vpop.f32.mrf.mxu0
    %955 = vdwg.mxu0
    %956 = vmatprep.subr.mxu0 0.0
    %957 = vmatpush1.msra.mxu0 %v103
    %958 = vmatprep.subr.mxu0 0.0
    %959 = vmatpush1.msra.mxu0 %v101
    %960 = vmatprep.subr.mxu0 0.0
    %961 = vmatpush1.msra.mxu0 %v99
    %962 = vmatprep.subr.mxu0 0.0
    %963 = vmatpush1.msra.mxu0 %v97
    %964 = vmatprep.subr.mxu0 0.0
    %965 = vmatpush1.msra.mxu0 %v95
    %966 = vmatprep.subr.mxu0 0.0
    %967 = vmatpush1.msra.mxu0 %v93
    %968 = vmatprep.subr.mxu0 0.0
    %969 = vmatpush1.msra.mxu0 %v91
    %970 = vmatprep.subr.mxu0 0.0
    %971 = vmatpush1.msra.mxu0 %v89
    %972 = vmatprep.subr.mxu0 0.0
    %973 = vmatpush1.msra.mxu0 %v87
    %974 = vmatprep.subr.mxu0 0.0
    %975 = vmatpush1.msra.mxu0 %v85
    %976 = vmatprep.subr.mxu0 0.0
    %977 = vmatpush1.msra.mxu0 %v83
    %978 = vmatprep.subr.mxu0 0.0
    %979 = vmatpush1.msra.mxu0 %v81
    %980 = vmatprep.subr.mxu0 0.0
    %981 = vmatpush1.msra.mxu0 %v79
    %982 = vmatprep.subr.mxu0 0.0
    %983 = vmatpush1.msra.mxu0 %v77
    %984 = vmatprep.subr.mxu0 0.0
    %985 = vmatpush1.msra.mxu0 %v75
    %986 = vmatprep.subr.mxu0 0.0
    %987 = vmatpush1.msra.mxu0 %v73
    %988 = vmatprep.subr.mxu0 0.0
    %989 = vmatpush2.msra.mxu0 0.0
    %990 = vmatprep.subr.mxu0 0.0
    %991 = vmatpush2.msra.mxu0 0.0
    %992 = vmatprep.subr.mxu0 0.0
    %993 = vmatpush2.msra.mxu0 0.0
    %994 = vmatprep.subr.mxu0 0.0
    %995 = vmatpush2.msra.mxu0 0.0
    %996 = vmatprep.subr.mxu0 0.0
    %997 = vmatpush2.msra.mxu0 0.0
    %998 = vmatprep.subr.mxu0 0.0
    %999 = vmatpush2.msra.mxu0 0.0
    %1000 = vmatprep.subr.mxu0 0.0
    %1001 = vmatpush2.msra.mxu0 0.0
    %1002 = vmatprep.subr.mxu0 0.0
    %1003 = vmatpush2.msra.mxu0 0.0
    %1004 = vmatprep.subr.mxu0 0.0
    %1005 = vmatpush2.msra.mxu0 0.0
    %1006 = vmatprep.subr.mxu0 0.0
    %1007 = vmatpush2.msra.mxu0 0.0
    %1008 = vmatprep.subr.mxu0 0.0
    %1009 = vmatpush2.msra.mxu0 0.0
    %1010 = vmatprep.subr.mxu0 0.0
    %1011 = vmatpush2.msra.mxu0 0.0
    %1012 = vmatprep.subr.mxu0 0.0
    %1013 = vmatpush2.msra.mxu0 0.0
    %1014 = vmatprep.subr.mxu0 0.0
    %1015 = vmatpush2.msra.mxu0 0.0
    %1016 = vmatprep.subr.mxu0 0.0
    %1017 = vmatpush2.msra.mxu0 0.0
    %1018 = vmatprep.subr.mxu0 0.0
    %1019 = vmatpush2.msra.mxu0 0.0
    %1020 = vmatprep.mubr.f32.mxu0 0.0
    %1021 = vmatmul.mubr.f32.gmra.mxu0 %v863
    %v1022 = vpop.f32.mrf.mxu0
    %v1023 = vadd.f32 0.0, %v1022
    %v1024 = vpop.f32.mrf.mxu0
    %1025 = vmatprep.mubr.f32.mxu0 0.0
    %1026 = vmatmul.mubr.f32.gmra.mxu0 %v864
    %v1027 = vpop.f32.mrf.mxu0
    %v1028 = vadd.f32 0.0, %v1027
    %v1029 = vpop.f32.mrf.mxu0
    %1030 = vmatprep.mubr.f32.mxu0 0.0
    %1031 = vmatmul.mubr.f32.gmra.mxu0 %v877
    %v1032 = vpop.f32.mrf.mxu0
    %v1033 = vadd.f32 0.0, %v1032
    %v1034 = vpop.f32.mrf.mxu0
    %1035 = vmatprep.mubr.f32.mxu0 0.0
    %1036 = vmatmul.mubr.f32.gmra.mxu0 %v878
    %v1037 = vpop.f32.mrf.mxu0
    %v1038 = vadd.f32 0.0, %v1037
    %v1039 = vpop.f32.mrf.mxu0
    %1040 = vdwg.mxu0
    %v1041 = vmul.f32 %v120, %v1023
    %v1042 = vmul.f32 %v121, %v1028
    %v1043 = vmul.f32 %v122, %v1033
    %v1044 = vmul.f32 %v123, %v1038
    %v1045 = vsub.f32 %v1041, %v1043
    %v1046 = vsub.f32 %v1042, %v1044
    %v1047 = vadd.f32 %v1045, %v948
    %v1048 = vadd.f32 %v1046, %v953
    %v1049 = vmul.f32 %v1047, %v1047
    %v1050 = vmul.f32 %v1048, %v1048
    %v1052 = vsel %vm236, 1.0, 0
    %v1055 = vsel %vm236, %v1049, 0
    %v1058 = vsel %vm236, %v1050, 0
    %1060 = vmatprep.subr.mxu0 0.0
    %1061 = vmatpush1.xpose.msra.mxu0 0.0
    %1062 = vmatprep.subr.mxu0 0.0
    %1063 = vmatpush1.xpose.msra.mxu0 0.0
    %1064 = vmatprep.subr.mxu0 0.0
    %1065 = vmatpush1.xpose.msra.mxu0 0.0
    %1066 = vmatprep.subr.mxu0 0.0
    %1067 = vmatpush1.xpose.msra.mxu0 0.0
    %1068 = vmatprep.subr.mxu0 0.0
    %1069 = vmatpush1.xpose.msra.mxu0 0.0
    %1070 = vmatprep.subr.mxu0 0.0
    %1071 = vmatpush1.xpose.msra.mxu0 0.0
    %1072 = vmatprep.subr.mxu0 0.0
    %1073 = vmatpush1.xpose.msra.mxu0 0.0
    %1074 = vmatprep.subr.mxu0 0.0
    %1075 = vmatpush1.xpose.msra.mxu0 0.0
    %1076 = vmatprep.subr.mxu0 0.0
    %1077 = vmatpush1.xpose.msra.mxu0 0.0
    %1078 = vmatprep.subr.mxu0 0.0
    %1079 = vmatpush1.xpose.msra.mxu0 0.0
    %1080 = vmatprep.subr.mxu0 0.0
    %1081 = vmatpush1.xpose.msra.mxu0 0.0
    %1082 = vmatprep.subr.mxu0 0.0
    %1083 = vmatpush1.xpose.msra.mxu0 0.0
    %1084 = vmatprep.subr.mxu0 0.0
    %1085 = vmatpush1.xpose.msra.mxu0 0.0
    %1086 = vmatprep.subr.mxu0 0.0
    %1087 = vmatpush1.xpose.msra.mxu0 0.0
    %1088 = vmatprep.subr.mxu0 0.0
    %1089 = vmatpush1.xpose.msra.mxu0 %v1058
    %1090 = vmatprep.subr.mxu0 0.0
    %1091 = vmatpush1.xpose.msra.mxu0 %v1055
    %1092 = vmatprep.subr.mxu0 0.0
    %1093 = vmatpush2.xpose.msra.mxu0 0.0
    %1094 = vmatprep.subr.mxu0 0.0
    %1095 = vmatpush2.xpose.msra.mxu0 0.0
    %1096 = vmatprep.subr.mxu0 0.0
    %1097 = vmatpush2.xpose.msra.mxu0 0.0
    %1098 = vmatprep.subr.mxu0 0.0
    %1099 = vmatpush2.xpose.msra.mxu0 0.0
    %1100 = vmatprep.subr.mxu0 0.0
    %1101 = vmatpush2.xpose.msra.mxu0 0.0
    %1102 = vmatprep.subr.mxu0 0.0
    %1103 = vmatpush2.xpose.msra.mxu0 0.0
    %1104 = vmatprep.subr.mxu0 0.0
    %1105 = vmatpush2.xpose.msra.mxu0 0.0
    %1106 = vmatprep.subr.mxu0 0.0
    %1107 = vmatpush2.xpose.msra.mxu0 0.0
    %1108 = vmatprep.subr.mxu0 0.0
    %1109 = vmatpush2.xpose.msra.mxu0 0.0
    %1110 = vmatprep.subr.mxu0 0.0
    %1111 = vmatpush2.xpose.msra.mxu0 0.0
    %1112 = vmatprep.subr.mxu0 0.0
    %1113 = vmatpush2.xpose.msra.mxu0 0.0
    %1114 = vmatprep.subr.mxu0 0.0
    %1115 = vmatpush2.xpose.msra.mxu0 0.0
    %1116 = vmatprep.subr.mxu0 0.0
    %1117 = vmatpush2.xpose.msra.mxu0 0.0
    %1118 = vmatprep.subr.mxu0 0.0
    %1119 = vmatpush2.xpose.msra.mxu0 0.0
    %1120 = vmatprep.subr.mxu0 0.0
    %1121 = vmatpush2.xpose.msra.mxu0 0.0
    %1122 = vmatprep.subr.mxu0 0.0
    %1123 = vmatpush2.xpose.msra.mxu0 0.0
    %1124 = vmatprep.mubr.f32.mxu0 0.0
    %1125 = vmatmul.mubr.f32.gmra.mxu0 %v1052
    %v1126 = vpop.f32.mrf.mxu0
    %v1127 = vadd.f32 32.0, %v1126
    %v1128 = vpop.f32.mrf.mxu0
    %1129 = vdwg.mxu0
    %v1130 = vld [vmem:[%s4] sm:$0x1]
    %vm1131 = vcmp.gt.f32.partialorder %v1130, 0.0
    %v1132 = vmul.f32 %v1130, %v1127
    %v1133 = vsel %vm1131, %v1132, 1.0
    %v1134 = vlog2.pop %v1133
    %v1135 = vmul.f32 %v1134, 0.6931472
    %v1136 = vmul.f32 %v1130, %v1135
    %v1137 = vsel %vm1131, %v1136, 0.0
    %vm1138 = vcmask 122880
    %v1139 = vsel %vm1138, %v1137, 0.0
    %1140 = vadd.xlane.f32.xlu0 %v1139
    %v1141 = vpop.xlane.xlu0 %1140
    %v1142 = vrot.slane %v1141, 4
    %v1143 = vadd.f32 %v1141, %v1142
    %v1144 = vrot.slane %v1143, 2
    %v1145 = vadd.f32 %v1143, %v1144
    %v1146 = vrot.slane %v1145, 1
    %v1147 = vadd.f32 %v1145, %v1146
    %s1148 = vtos %v1147
    %v1149 = vstv %s1148
    %v1150 = vlog2.pop %v848
    %v1151 = vmul.f32 %v1150, 0.6931472
    %v1152 = vsel %vm1138, %v1130, 0.0
    %1153 = vadd.xlane.f32.xlu0 %v1152
    %v1154 = vpop.xlane.xlu0 %1153
    %v1155 = vrot.slane %v1154, 4
    %v1156 = vadd.f32 %v1154, %v1155
    %v1157 = vrot.slane %v1156, 2
    %v1158 = vadd.f32 %v1156, %v1157
    %v1159 = vrot.slane %v1158, 1
    %v1160 = vadd.f32 %v1158, %v1159
    %s1161 = vtos %v1160
    %v1162 = vstv %s1161
    %v1163 = vmul.f32 %v1151, %v1162
    %v1164 = vadd.f32 %v1149, %v1163
    %v1165 = vmul.f32 %v278, 1e-07
    %v1166 = vadd.f32 %v1164, %v1165
    %vm1167 = vcmask 7168
    %v1168 = vsel %vm1167, %v1166, %v278
    %vm1169 = vcmask 8192
    %1170 = vst.msk [vmem:[#allocation3] sm:$0x1] %vm1169, %v1168
    // Predicated region
    $region26: #{tpu_custom_call.1} parent=1 // pred_check
      _
    $region27: #{tpu_custom_call.1} parent=1 // pred_check_branch
      %1172 = sbr.rel (0) target = $region29
    $region28: #{tpu_custom_call.1} parent=1 // pred_region
      %s1174 = ssub.s32 16, 16
      %1175 = vsyncadd [#allocation4], %s1174
      %s1177 = sshll.u32 [#allocation3], 4
      %s1178 = int_to_ptr.vmem [resolvable:$true] %s1177
      %1180 = dma.vmem_to_hbm [thread:$0]  %s1178, 16, %s6, [#allocation4]
    $region29: #{tpu_custom_call.1} parent=1 // pred_fallthru
      _
    // Predicated region
    $region30: #{tpu_custom_call.1} parent=1 // pred_check
      _
    $region31: #{tpu_custom_call.1} parent=1 // pred_check_branch
      %1182 = sbr.rel (0) target = $region33
    $region32: #{tpu_custom_call.1} parent=1 // pred_region
      %1183 = dma.done [#allocation4], 16
    $region33: #{tpu_custom_call.1} parent=1 // pred_fallthru
      _
    %1184 = vsyncpa [#allocation4], 1

</llo_original>
